<compile_context>
chip_gen: v5e
topology: v5e:2x2
jax: 0.10.0
libtpu: 0.0.40
codegen_flags: <defaults>
</compile_context>

<pallas_src>
import math
import jax
import jax.numpy as jnp
from jax.experimental import pallas as pl
from jax.experimental.pallas import tpu as pltpu

_NEG = -1e30  # finite "minus infinity" for padded class columns


def _round_up(x, m):
    return (x + m - 1) // m * m


def _vmem_capacity_bytes():
    """Physical VMEM per TensorCore; conservative fallback if query fails."""
    try:
        cap = getattr(pltpu.get_tpu_info(), "vmem_capacity_bytes", None)
        if cap:
            return int(cap)
    except Exception:
        pass
    return 64 << 20  # assume the smallest (v7x-sized) VMEM if unknown


def _vmem_budget_bytes():
    cap = _vmem_capacity_bytes()
    # Leave compiler headroom: 128 MiB (v5e/v6e) -> 48 MiB, 64 MiB (v7x) -> 32 MiB.
    return min(cap // 2, 48 << 20)


def _softmax_regressor_kernel(x_ref, w_ref, b_ref, o_ref):
    # x_ref: (TB, D)  w_ref: (D, C_pad)  b_ref: (1, C_pad)  o_ref: (TB, C_pad)
    x = x_ref[...]
    w = w_ref[...]
    if x.dtype != w.dtype:
        # Cheap VPU cast inside the kernel: enables the bf16 MXU path when the
        # weight was prepared in bf16, without an extra upstream HBM pass.
        x = x.astype(w.dtype)

    # MXU matmul with f32 accumulation, bias add on VPU.
    logits = jnp.dot(x, w, preferred_element_type=jnp.float32) + b_ref[...]

    # Numerically-stable log-softmax over the lane-dense, padded class axis.
    m = jnp.max(logits, axis=-1, keepdims=True)
    shifted = logits - m
    lse = jnp.log(jnp.sum(jnp.exp(shifted), axis=-1, keepdims=True))
    o_ref[...] = (shifted - lse).astype(o_ref.dtype)


def prepare_params(weight, bias, *, weight_dtype=jnp.float32):
    """One-time setup: transpose + lane-pad the linear params.

    weight: (C, D) (PyTorch layout), bias: (C,)
    weight_dtype: jnp.bfloat16 recommended on v6e/v7x (bf16-native MXU) when
                  the model tolerates it; bias stays f32 (added post-matmul).
    returns w_t_pad: (D, C_pad) weight_dtype, b_pad: (1, C_pad) f32
    """
    C, D = weight.shape
    c_pad = _round_up(C, 128)
    w_t = jnp.zeros((D, c_pad), weight_dtype).at[:, :C].set(
        weight.T.astype(weight_dtype))
    b = jnp.full((1, c_pad), _NEG, jnp.float32).at[0, :C].set(
        bias.astype(jnp.float32))
    return w_t, b


def _pick_batch_tile(B, D, c_pad, x_bytes, w_bytes, vmem_budget, tb_max):
    """Largest multiple-of-8 batch tile <= tb_max fitting the VMEM budget."""
    tb = min(tb_max, _round_up(B, 8))
    # Megacore (v7x, 2 TensorCores): keep >= 2 grid steps when there is enough
    # work to split, so dimension_semantics=("parallel",) actually shards.
    if B > 8:
        tb = min(tb, _round_up(pl.cdiv(B, 2), 8))

    def need(t):
        # Pallas double-buffers EVERY BlockSpec'd operand by default, the
        # constant-index weight/bias included.
        return (2 * t * D * x_bytes            # X tiles (double-buffered)
                + 2 * t * c_pad * 4            # O tiles (double-buffered, f32)
                + 2 * D * c_pad * w_bytes      # weight (2 buffers)
                + 2 * c_pad * 4)               # bias (2 buffers)

    while tb > 8 and need(tb) > vmem_budget:
        tb = max(8, _round_up(tb // 2, 8))
    return tb


def softmax_regressor_padded(x, w_t_pad, b_pad, *, tb_max=1024):
    """x: (B, D); params from prepare_params(); returns (B, C_pad) f32.

    Performance-sensitive consumers should use this padded output directly
    (slice lazily at the consumer) to avoid an extra HBM pass when C < 128.
    """
    B, D = x.shape
    d_w, c_pad = w_t_pad.shape
    assert d_w == D

    budget = _vmem_budget_bytes()
    tb = _pick_batch_tile(B, D, c_pad, x.dtype.itemsize,
                          w_t_pad.dtype.itemsize, budget, tb_max)
    grid = (pl.cdiv(B, tb),)  # unpadded batch: partial last block is masked

    cost = pl.CostEstimate(
        flops=2 * B * D * c_pad,
        transcendentals=B * c_pad + B,  # exp per logit + log per row
        bytes_accessed=(B * D * x.dtype.itemsize
                        + D * c_pad * w_t_pad.dtype.itemsize
                        + c_pad * 4
                        + B * c_pad * 4))

    return pl.pallas_call(
        _softmax_regressor_kernel,
        out_shape=jax.ShapeDtypeStruct((B, c_pad), jnp.float32),
        grid_spec=pl.GridSpec(
            grid=grid,
            in_specs=[
                pl.BlockSpec((tb, D), lambda i: (i, 0)),       # X: streamed
                pl.BlockSpec((D, c_pad), lambda i: (0, 0)),    # W: resident
                pl.BlockSpec((1, c_pad), lambda i: (0, 0)),    # b: resident
            ],
            out_specs=pl.BlockSpec((tb, c_pad), lambda i: (i, 0)),
        ),
        compiler_params=pltpu.CompilerParams(
            dimension_semantics=("parallel",),
            vmem_limit_bytes=min(budget + (8 << 20), _vmem_capacity_bytes()),
        ),
        cost_estimate=cost,
    )(x, w_t_pad, b_pad)


def softmax_regressor(x, w_t_pad, b_pad, num_classes, *, tb_max=1024):
    """Module-compatible forward: returns (B, num_classes) log-probs.

    Note: the class-dim slice is an extra HBM pass when num_classes < 128;
    prefer softmax_regressor_padded() in hot paths and slice at the consumer.
    """
    return softmax_regressor_padded(x, w_t_pad, b_pad,
                                    tb_max=tb_max)[:, :num_classes]


def log_softmax_ref(x, weight, bias):
    logits = x @ weight.T + bias
    m = jnp.max(logits, axis=1, keepdims=True)
    s = logits - m
    return s - jnp.log(jnp.sum(jnp.exp(s), axis=1, keepdims=True))


if __name__ == "__main__":
    # Shapes consistent with the module's forward: X is (batch, input_size).
    batch, input_size, num_classes = 8, 32, 16

    key = jax.random.PRNGKey(0)
    kx, kw, kb = jax.random.split(key, 3)

    # Deterministic init mirroring nn.Linear's uniform(-1/sqrt(D), 1/sqrt(D)).
    bound = 1.0 / math.sqrt(input_size)
    weight = jax.random.uniform(kw, (num_classes, input_size),
                                dtype=jnp.float32, minval=-bound, maxval=bound)
    bias = jax.random.uniform(kb, (num_classes,),
                              dtype=jnp.float32, minval=-bound, maxval=bound)
    x = jax.random.normal(kx, (batch, input_size), dtype=jnp.float32)

    # One-time param prep (transpose + lane padding) kept out of the hot path.
    w_t_pad, b_pad = prepare_params(weight, bias)

    out = jax.block_until_ready(softmax_regressor(x, w_t_pad, b_pad, num_classes))
    ref = log_softmax_ref(x, weight, bias)
    assert out.shape == (batch, num_classes)
    assert jnp.allclose(out, ref, atol=1e-5, rtol=1e-5)

    # Multi-step grid + masked partial last block (no batch-padding copy):
    batch2 = 300
    x2 = jax.random.normal(jax.random.PRNGKey(1), (batch2, input_size),
                           dtype=jnp.float32)
    out2_pad = jax.block_until_ready(
        softmax_regressor_padded(x2, w_t_pad, b_pad, tb_max=128))
    ref2 = log_softmax_ref(x2, weight, bias)
    assert out2_pad.shape[0] == batch2
    # Consumer-side lazy slice of the padded class axis.
    assert jnp.allclose(out2_pad[:, :num_classes], ref2, atol=1e-5, rtol=1e-5)

    # bf16-weight path (bf16-native MXU on v6e/v7x); looser tolerance.
    w_t_pad_bf16, b_pad_bf16 = prepare_params(weight, bias,
                                              weight_dtype=jnp.bfloat16)
    out3 = jax.block_until_ready(
        softmax_regressor(x, w_t_pad_bf16, b_pad_bf16, num_classes))
    assert out3.shape == (batch, num_classes)
    assert jnp.allclose(out3, ref, atol=1e-1, rtol=0)

    print("KERNEL_OK")
</pallas_src>

<mosaic_0001>
module attributes {stable_mosaic.version = 11 : i64} {
  func.func @_softmax_regressor_kernel(%arg0: i32, %arg1: memref<8x32xf32, #tpu.memory_space<vmem>>, %arg2: memref<32x128xf32, #tpu.memory_space<vmem>>, %arg3: memref<1x128xf32, #tpu.memory_space<vmem>>, %arg4: memref<8x128xf32, #tpu.memory_space<vmem>>) attributes {dimension_semantics = [#tpu.dimension_semantics<parallel>], iteration_bounds = array<i64: 1>, scalar_prefetch = 0 : i64, scratch_operands = 0 : i64, tpu.core_type = #tpu.core_type<tc>, window_params = [{transform_indices = @transform_0, window_bounds = array<i64: 8, 32>}, {pipeline_mode = #tpu.pipeline_mode<synchronous>, transform_indices = @transform_1, window_bounds = array<i64: 32, 128>}, {pipeline_mode = #tpu.pipeline_mode<synchronous>, transform_indices = @transform_2, window_bounds = array<i64: 1, 128>}, {transform_indices = @transform_3, window_bounds = array<i64: 8, 128>}]} {
    %c0 = arith.constant 0 : index
    %c0_0 = arith.constant 0 : index
    %0 = vector.load %arg1[%c0, %c0_0] : memref<8x32xf32, #tpu.memory_space<vmem>>, vector<8x32xf32>
    %c0_1 = arith.constant 0 : index
    %c0_2 = arith.constant 0 : index
    %1 = vector.load %arg2[%c0_1, %c0_2] : memref<32x128xf32, #tpu.memory_space<vmem>>, vector<32x128xf32>
    %cst = arith.constant dense<0.000000e+00> : vector<8x128xf32>
    %2 = tpu.matmul %0, %1, %cst {dimension_numbers = #tpu.dot_dimension_numbers<[1], [0], [0], [1], [0, 0, 1, 1], [], []>} : vector<8x32xf32>, vector<32x128xf32>, vector<8x128xf32> -> vector<8x128xf32>
    %c0_3 = arith.constant 0 : index
    %c0_4 = arith.constant 0 : index
    %3 = vector.load %arg3[%c0_3, %c0_4] : memref<1x128xf32, #tpu.memory_space<vmem>>, vector<1x128xf32>
    %4 = vector.broadcast %3 : vector<1x128xf32> to vector<8x128xf32>
    %5 = arith.addf %2, %4 : vector<8x128xf32>
    %cst_5 = arith.constant dense<0xFF800000> : vector<8xf32>
    %6 = vector.multi_reduction <maximumf>, %5, %cst_5 [1] : vector<8x128xf32> to vector<8xf32>
    %7 = vector.shape_cast %6 : vector<8xf32> to vector<8x1xf32>
    %8 = vector.broadcast %7 : vector<8x1xf32> to vector<8x128xf32>
    %9 = arith.subf %5, %8 : vector<8x128xf32>
    %10 = math.exp %9 : vector<8x128xf32>
    %cst_6 = arith.constant dense<0.000000e+00> : vector<8xf32>
    %11 = vector.multi_reduction <add>, %10, %cst_6 [1] : vector<8x128xf32> to vector<8xf32>
    %12 = vector.shape_cast %11 : vector<8xf32> to vector<8x1xf32>
    %13 = math.log %12 : vector<8x1xf32>
    %14 = vector.broadcast %13 : vector<8x1xf32> to vector<8x128xf32>
    %15 = arith.subf %9, %14 : vector<8x128xf32>
    %c0_7 = arith.constant 0 : index
    %c0_8 = arith.constant 0 : index
    %16 = vector.load %arg4[%c0_7, %c0_8] : memref<8x128xf32, #tpu.memory_space<vmem>>, vector<8x128xf32>
    tpu.vector_store %arg4[%c0_7, %c0_8], %15 {strides = array<i32>} : memref<8x128xf32, #tpu.memory_space<vmem>>, vector<8x128xf32>,
    return
  }
  func.func @transform_0(%arg0: i32) -> (i32, i32) {
    %c0_i32 = arith.constant 0 : i32
    %c0_i32_0 = arith.constant 0 : i32
    return %arg0, %c0_i32 : i32, i32
  }
  func.func @transform_1(%arg0: i32) -> (i32, i32) {
    %c0_i32 = arith.constant 0 : i32
    %c0_i32_0 = arith.constant 0 : i32
    %c0_i32_1 = arith.constant 0 : i32
    return %c0_i32, %c0_i32_0 : i32, i32
  }
  func.func @transform_2(%arg0: i32) -> (i32, i32) {
    %c0_i32 = arith.constant 0 : i32
    %c0_i32_0 = arith.constant 0 : i32
    %c0_i32_1 = arith.constant 0 : i32
    return %c0_i32, %c0_i32_0 : i32, i32
  }
  func.func @transform_3(%arg0: i32) -> (i32, i32) {
    %c0_i32 = arith.constant 0 : i32
    %c0_i32_0 = arith.constant 0 : i32
    return %arg0, %c0_i32 : i32, i32
  }
}

</mosaic_0001>

<llo_original>
// kernel: tpu_custom_call.1
$region0: #{tpu_custom_call.1}
  #allocation0 [shape = 'u32[]', space=smem, size = 0x4, offset = 0x4, fixed_abs, tag = 'smem constant byte address 0x4 - core index']
  #allocation1 [shape = 'u32[72,128]{1,0:T(1,128)}', space=vmem, size = 0x9000, scoped, tag = 'internal scratch']
  %s0 = inlined_call_operand.hbm [shape: f32[8,32], index: 0, kind: input, shape index: {}]
  %s1 = inlined_call_operand.hbm [shape: f32[32,128], index: 1, kind: input, shape index: {}]
  %s2 = inlined_call_operand.vmem [shape: f32[1,128], index: 2, kind: input, shape index: {}]
  %s3 = inlined_call_operand.hbm [shape: f32[8,128], index: 3, kind: output, shape index: {}]
  %s4 = sld [smem:[#allocation0]]
  $region30: #{tpu_custom_call.1} parent=0
    _
  %s6 = ssub.s32 1, %s4
  %s7 = scalar_select 0, %s6, %s4
  $region1: #{tpu_custom_call.1} parent=0
    #allocation2 [shape = 'u8[4096]{0}', space=vmem, size = 0x1000, scoped, tag = 'input window, operand 0, single buffered']
    #allocation3 [shape = 's32[1]{0}', space=sflag, size = 0x4, scoped, tag = 'scoped memory for tpu_custom_call.1']
    #allocation4 [shape = 's32[1]{0}', space=sflag, size = 0x4, scoped, tag = 'scoped memory for tpu_custom_call.1']
    #allocation5 [shape = 'u8[16384]{0}', space=vmem, size = 0x4000, scoped, tag = 'input window, operand 1, single buffered']
    #allocation6 [shape = 's32[1]{0}', space=sflag, size = 0x4, scoped, tag = 'scoped memory for tpu_custom_call.1']
    #allocation7 [shape = 'u8[4096]{0}', space=vmem, size = 0x1000, scoped, tag = 'output window, operand 0, single buffered']
    %8 = vsyncpa [#allocation3], 0
    %9 = vsyncpa [#allocation6], 0
    %10 = vsyncpa [#allocation4], 0
    // Predicated region
    $region2: #{tpu_custom_call.1} parent=1 // pred_check
      _
    $region3: #{tpu_custom_call.1} parent=1 // pred_check_branch
      %12 = sbr.rel (0) target = $region5
    $region4: #{tpu_custom_call.1} parent=1 // pred_region
      %14 = vsyncadd [#allocation3], 0
      %s16 = sshll.u32 %s0, 4
      %s17 = int_to_ptr.hbm [resolvable:$true] %s16
      %s18 = sshll.u32 [#allocation2], 4
      %s19 = int_to_ptr.vmem [resolvable:$true] %s18
      %21 = dma.hbm_to_vmem [thread:$0]  %s17, 128, %s19, [#allocation3]
    $region5: #{tpu_custom_call.1} parent=1 // pred_fallthru
      _
    // Predicated region
    $region6: #{tpu_custom_call.1} parent=1 // pred_check
      _
    $region7: #{tpu_custom_call.1} parent=1 // pred_check_branch
      %23 = sbr.rel (0) target = $region9
    $region8: #{tpu_custom_call.1} parent=1 // pred_region
      %25 = vsyncadd [#allocation6], 0
      %s26 = sshll.u32 %s1, 4
      %s27 = int_to_ptr.hbm [resolvable:$true] %s26
      %s28 = sshll.u32 [#allocation5], 4
      %s29 = int_to_ptr.vmem [resolvable:$true] %s28
      %34 = dma.hbm_to_vmem [thread:$0]  %s27, 512, %s29, [#allocation6], 128, 128, 8
    $region9: #{tpu_custom_call.1} parent=1 // pred_fallthru
      _
    // Predicated region
    $region10: #{tpu_custom_call.1} parent=1 // pred_check
      _
    $region11: #{tpu_custom_call.1} parent=1 // pred_check_branch
      %36 = sbr.rel (0) target = $region13
    $region12: #{tpu_custom_call.1} parent=1 // pred_region
      _
    $region13: #{tpu_custom_call.1} parent=1 // pred_fallthru
      _
    // Predicated region
    $region14: #{tpu_custom_call.1} parent=1 // pred_check
      _
    $region15: #{tpu_custom_call.1} parent=1 // pred_check_branch
      %38 = sbr.rel (0) target = $region17
    $region16: #{tpu_custom_call.1} parent=1 // pred_region
      %40 = dma.done [#allocation3], 128
    $region17: #{tpu_custom_call.1} parent=1 // pred_fallthru
      _
    // Predicated region
    $region18: #{tpu_custom_call.1} parent=1 // pred_check
      _
    $region19: #{tpu_custom_call.1} parent=1 // pred_check_branch
      %42 = sbr.rel (0) target = $region21
    $region20: #{tpu_custom_call.1} parent=1 // pred_region
      %44 = dma.done [#allocation6], 512
    $region21: #{tpu_custom_call.1} parent=1 // pred_fallthru
      _
    %v45 = vld [vmem:[#allocation2] sm:$0xff]
    %v46 = vld [vmem:[#allocation5] sm:$0xff]
    %v47 = vld [vmem:[#allocation5 + $0x8] sm:$0xff]
    %v48 = vld [vmem:[#allocation5 + $0x10] sm:$0xff]
    %v49 = vld [vmem:[#allocation5 + $0x18] sm:$0xff]
    %v50 = vld [vmem:[%s2] sm:$0x1]
    %v52 = vperm.slane %v50, 0
    %vm54 = vcmask 261120
    %v56 = vsel %vm54, %v45, 0
    %58 = vmatpush.msra.mxu0 0.0
    %59 = vmatpush.msra.mxu0 0.0
    %60 = vmatpush.msra.mxu0 0.0
    %61 = vmatpush.msra.mxu0 0.0
    %62 = vmatpush.msra.mxu0 0.0
    %63 = vmatpush.msra.mxu0 0.0
    %64 = vmatpush.msra.mxu0 0.0
    %65 = vmatpush.msra.mxu0 0.0
    %66 = vmatpush.msra.mxu0 0.0
    %67 = vmatpush.msra.mxu0 0.0
    %68 = vmatpush.msra.mxu0 0.0
    %69 = vmatpush.msra.mxu0 0.0
    %70 = vmatpush.msra.mxu0 %v49
    %71 = vmatpush.msra.mxu0 %v48
    %72 = vmatpush.msra.mxu0 %v47
    %73 = vmatpush.msra.mxu0 %v46
    %74 = vmatmul.f32.gmra.mxu0 %v56
    %v75 = vpop.f32.mrf.mxu0
    %v76 = vadd.f32 %v52, %v75
    %77 = vdwg.mxu0
    %78 = vmax.xlane.f32.xlu0 %v76
    %v79 = vpop.xlane.xlu0 %78
    %v80 = vsub.f32 %v76, %v79
    %v81 = vmul.f32 %v80, 1.442695
    %v82 = vpow.pop %v81
    %83 = vadd.xlane.f32.xlu0 %v82
    %v84 = vpop.xlane.xlu0 %83
    %v85 = vlog2.pop %v84
    %v86 = vmul.f32 %v85, 0.6931472
    %v87 = vsub.f32 %v80, %v86
    %88 = vst [vmem:[#allocation7] sm:$0xff] %v87
    // Predicated region
    $region22: #{tpu_custom_call.1} parent=1 // pred_check
      _
    $region23: #{tpu_custom_call.1} parent=1 // pred_check_branch
      %90 = sbr.rel (0) target = $region25
    $region24: #{tpu_custom_call.1} parent=1 // pred_region
      %92 = vsyncadd [#allocation4], 0
      %s94 = sshll.u32 [#allocation7], 4
      %s95 = int_to_ptr.vmem [resolvable:$true] %s94
      %s96 = sshll.u32 %s3, 4
      %s97 = int_to_ptr.hbm [resolvable:$true] %s96
      %99 = dma.vmem_to_hbm [thread:$0]  %s95, 128, %s97, [#allocation4]
    $region25: #{tpu_custom_call.1} parent=1 // pred_fallthru
      _
    // Predicated region
    $region26: #{tpu_custom_call.1} parent=1 // pred_check
      _
    $region27: #{tpu_custom_call.1} parent=1 // pred_check_branch
      %101 = sbr.rel (0) target = $region29
    $region28: #{tpu_custom_call.1} parent=1 // pred_region
      %103 = dma.done [#allocation4], 128
    $region29: #{tpu_custom_call.1} parent=1 // pred_fallthru
      _
    %104 = vsyncpa [#allocation3], 1
    %105 = vsyncpa [#allocation6], 1
    %106 = vsyncpa [#allocation4], 1

</llo_original>
